<compile_context>
chip_gen: v5e
topology: v5e:2x2
jax: 0.10.0
libtpu: 0.0.40
codegen_flags: <defaults>
</compile_context>

<pallas_src>
import jax
import jax.numpy as jnp
from jax import lax
from jax.experimental import pallas as pl
from jax.experimental.pallas import tpu as pltpu


# ----------------------------------------------------------------------------
# Pallas kernel
# ----------------------------------------------------------------------------
def _make_kernel(H, WCin, WCout, has_projection):
    """Per-batch-element kernel, specialized on static shapes."""

    def body(x_ref, s1_ref, b1_ref, t1_ref, s2_ref, b2_ref, t2_ref, tp_ref,
             o_ref, band1, band2):
        x = x_ref[0]                                             # (H, W*Cin) f32

        # ---- BN1 (folded scale/bias) + ReLU --------------------------------
        pre = jnp.maximum(x * s1_ref[...] + b1_ref[...], 0.0)    # (H, W*Cin)

        # ---- shortcut --------------------------------------------------------
        if has_projection:
            # 1x1 conv folded into a block-diagonal (W*Cin, W*Cout) matmul.
            shortcut = jnp.dot(pre.astype(jnp.bfloat16), tp_ref[...],
                               preferred_element_type=jnp.float32)
        else:
            # identity shortcut uses the ORIGINAL input x (Cin == Cout here).
            shortcut = x

        # ---- conv1: 3x3, stride 1, pad 1 ------------------------------------
        # kw taps + W zero-padding live inside t1; only H padding needs the
        # band scratch.  Zero just the two border rows (interior is fully
        # overwritten every grid step).
        zero_in = jnp.zeros((1, WCin), jnp.float32)
        band1[0:1, :] = zero_in
        band1[H + 1:H + 2, :] = zero_in
        band1[1:H + 1, :] = pre

        acc1 = None
        for kh in range(3):                                      # unrolled
            term = jnp.dot(band1[kh:kh + H, :].astype(jnp.bfloat16),
                           t1_ref[kh],
                           preferred_element_type=jnp.float32)   # (H, W*Cout)
            acc1 = term if acc1 is None else acc1 + term

        # ---- BN2 + ReLU ------------------------------------------------------
        act2 = jnp.maximum(acc1 * s2_ref[...] + b2_ref[...], 0.0)  # (H, W*Cout)

        # ---- conv2: 3x3, stride 1, pad 1  + residual add ---------------------
        zero_out = jnp.zeros((1, WCout), jnp.float32)
        band2[0:1, :] = zero_out
        band2[H + 1:H + 2, :] = zero_out
        band2[1:H + 1, :] = act2

        acc2 = shortcut
        for kh in range(3):                                      # unrolled
            acc2 = acc2 + jnp.dot(band2[kh:kh + H, :].astype(jnp.bfloat16),
                                  t2_ref[kh],
                                  preferred_element_type=jnp.float32)

        o_ref[0] = acc2                                          # lane-dense store

    if has_projection:
        def kernel(x_ref, s1_ref, b1_ref, t1_ref, s2_ref, b2_ref, t2_ref,
                   tp_ref, o_ref, band1, band2):
            body(x_ref, s1_ref, b1_ref, t1_ref, s2_ref, b2_ref, t2_ref,
                 tp_ref, o_ref, band1, band2)
    else:
        def kernel(x_ref, s1_ref, b1_ref, t1_ref, s2_ref, b2_ref, t2_ref,
                   o_ref, band1, band2):
            body(x_ref, s1_ref, b1_ref, t1_ref, s2_ref, b2_ref, t2_ref,
                 None, o_ref, band1, band2)

    return kernel


# ----------------------------------------------------------------------------
# Wrapper: layout plumbing, BN folding, banded-weight construction
# ----------------------------------------------------------------------------
def _band_matrices(wt, W):
    """Fold the kw taps + W zero-padding of a 3x3 conv into banded matrices.

    wt: torch-layout conv weight (Cout, Cin, 3, 3).
    Returns T of shape (3, W*Cin, W*Cout) with
      T[kh, u*Cin + c, v*Cout + o] = wt[o, c, kh, kw]  where u = v + kw - 1,
    and zero where u falls outside [0, W) (the W padding).
    Then conv(x)[y] = sum_kh band[y + kh] @ T[kh]  with band = x H-padded by 1.
    """
    Co, Ci, KH, KW = wt.shape
    wtT = jnp.transpose(wt, (2, 3, 1, 0)).astype(jnp.float32)    # (KH, KW, Ci, Co)
    eyes = jnp.stack([jnp.eye(W, W, k=1 - kw, dtype=jnp.float32)
                      for kw in range(KW)])                       # (KW, W, W)
    T = jnp.einsum('kuv,hkco->hucvo', eyes, wtT)                  # (KH, W, Ci, W, Co)
    return T.reshape(KH, W * Ci, W * Co)


def res_unit_block_pallas(x_nchw, params):
    N, Cin, H, W = x_nchw.shape
    Cout = params["conv1_w"].shape[0]
    has_projection = "proj_w" in params
    if not has_projection:
        assert Cin == Cout, "identity shortcut requires in_features == out_features"
    eps = 1e-5

    WCin, WCout = W * Cin, W * Cout

    # NCHW -> NHWC -> lane-dense (N, H, W*Cin): channel index fastest on lanes.
    x = jnp.transpose(x_nchw, (0, 2, 3, 1)).reshape(N, H, WCin).astype(jnp.float32)

    # Fold BN (inference) into per-channel scale/bias, tiled over W (lane axis).
    s1 = params["bn1_gamma"] / jnp.sqrt(params["bn1_var"] + eps)
    b1 = params["bn1_beta"] - params["bn1_mean"] * s1
    s2 = params["bn2_gamma"] / jnp.sqrt(params["bn2_var"] + eps)
    b2 = params["bn2_beta"] - params["bn2_mean"] * s2
    s1f = jnp.tile(s1, W).reshape(1, WCin).astype(jnp.float32)
    b1f = jnp.tile(b1, W).reshape(1, WCin).astype(jnp.float32)
    s2f = jnp.tile(s2, W).reshape(1, WCout).astype(jnp.float32)
    b2f = jnp.tile(b2, W).reshape(1, WCout).astype(jnp.float32)

    # Banded conv weights (bf16 operands, f32 accumulation in-kernel).
    t1 = _band_matrices(params["conv1_w"], W).astype(jnp.bfloat16)  # (3, WCin, WCout)
    t2 = _band_matrices(params["conv2_w"], W).astype(jnp.bfloat16)  # (3, WCout, WCout)

    def rep_spec(shape):
        nd = len(shape)
        return pl.BlockSpec(shape, lambda n, _nd=nd: (0,) * _nd)

    in_arrays = [x, s1f, b1f, t1, s2f, b2f, t2]
    in_specs = [
        pl.BlockSpec((1, H, WCin), lambda n: (n, 0, 0)),
        rep_spec((1, WCin)),             # s1
        rep_spec((1, WCin)),             # b1
        rep_spec((3, WCin, WCout)),      # t1
        rep_spec((1, WCout)),            # s2
        rep_spec((1, WCout)),            # b2
        rep_spec((3, WCout, WCout)),     # t2
    ]
    if has_projection:
        # 1x1 projection folded into a block-diagonal (WCin, WCout) matrix.
        wpT = jnp.transpose(params["proj_w"][:, :, 0, 0]).astype(jnp.float32)
        tp = jnp.einsum('uv,co->ucvo', jnp.eye(W, dtype=jnp.float32), wpT)
        tp = tp.reshape(WCin, WCout).astype(jnp.bfloat16)
        in_arrays.append(tp)
        in_specs.append(rep_spec((WCin, WCout)))

    kernel = _make_kernel(H, WCin, WCout, has_projection)

    out = pl.pallas_call(
        kernel,
        out_shape=jax.ShapeDtypeStruct((N, H, WCout), jnp.float32),
        grid_spec=pltpu.PrefetchScalarGridSpec(
            num_scalar_prefetch=0,
            grid=(N,),
            in_specs=in_specs,
            out_specs=pl.BlockSpec((1, H, WCout), lambda n: (n, 0, 0)),
            scratch_shapes=[
                pltpu.VMEM((H + 2, WCin), jnp.float32),   # H-padded pre-act band
                pltpu.VMEM((H + 2, WCout), jnp.float32),  # H-padded act2 band
            ],
        ),
        compiler_params=pltpu.CompilerParams(
            dimension_semantics=("parallel",)),           # v7x: use both TCs
    )(*in_arrays)

    # (N, H, W*Cout) -> NCHW
    return jnp.transpose(out.reshape(N, H, W, Cout), (0, 3, 1, 2))


# ----------------------------------------------------------------------------
# Pure-JAX reference (for correctness check)
# ----------------------------------------------------------------------------
def res_unit_block_ref(x_nchw, params):
    eps = 1e-5

    def bn(x, g, b, m, v):
        g, b, m, v = (t[None, :, None, None] for t in (g, b, m, v))
        return (x - m) / jnp.sqrt(v + eps) * g + b

    def conv(x, w, pad):
        return lax.conv_general_dilated(
            x, w, window_strides=(1, 1), padding=((pad, pad), (pad, pad)),
            dimension_numbers=("NCHW", "OIHW", "NCHW"))

    out = jax.nn.relu(bn(x_nchw, params["bn1_gamma"], params["bn1_beta"],
                         params["bn1_mean"], params["bn1_var"]))
    shortcut = conv(out, params["proj_w"], 0) if "proj_w" in params else x_nchw
    out = conv(out, params["conv1_w"], 1)
    out = jax.nn.relu(bn(out, params["bn2_gamma"], params["bn2_beta"],
                         params["bn2_mean"], params["bn2_var"]))
    out = conv(out, params["conv2_w"], 1)
    return out + shortcut


# ----------------------------------------------------------------------------
# Deterministic parameter init (shapes per ResUnitBlock.__init__)
# ----------------------------------------------------------------------------
def init_params(key, c_in, c_out, projection):
    ks = jax.random.split(key, 11)
    p = {
        "bn1_gamma": jax.random.uniform(ks[0], (c_in,), jnp.float32, 0.5, 1.5),
        "bn1_beta":  jax.random.normal(ks[1], (c_in,), jnp.float32) * 0.1,
        "bn1_mean":  jax.random.normal(ks[2], (c_in,), jnp.float32) * 0.1,
        "bn1_var":   jax.random.uniform(ks[3], (c_in,), jnp.float32, 0.5, 1.5),
        "conv1_w":   jax.random.normal(ks[4], (c_out, c_in, 3, 3), jnp.float32) * 0.1,
        "bn2_gamma": jax.random.uniform(ks[5], (c_out,), jnp.float32, 0.5, 1.5),
        "bn2_beta":  jax.random.normal(ks[6], (c_out,), jnp.float32) * 0.1,
        "bn2_mean":  jax.random.normal(ks[7], (c_out,), jnp.float32) * 0.1,
        "bn2_var":   jax.random.uniform(ks[8], (c_out,), jnp.float32, 0.5, 1.5),
        "conv2_w":   jax.random.normal(ks[9], (c_out, c_out, 3, 3), jnp.float32) * 0.1,
    }
    if projection:
        p["proj_w"] = jax.random.normal(ks[10], (c_out, c_in, 1, 1), jnp.float32) * 0.1
    return p


if __name__ == "__main__":
    key = jax.random.PRNGKey(0)
    kx, kp1, kp2 = jax.random.split(key, 3)

    N, H, W = 2, 16, 16

    # Case 1: in_features=4, out_features=8, stride=1 -> projection shortcut
    c_in, c_out = 4, 8
    x = jax.random.normal(kx, (N, c_in, H, W), jnp.float32)
    params = init_params(kp1, c_in, c_out, projection=True)
    out = jax.block_until_ready(res_unit_block_pallas(x, params))
    ref = res_unit_block_ref(x, params)
    assert out.shape == (N, c_out, H, W)
    assert jnp.allclose(out, ref, atol=5e-2, rtol=5e-2), "projection-block mismatch"

    # Case 2: in_features=out_features=4, stride=1 -> identity shortcut
    c_in2 = c_out2 = 4
    x2 = jax.random.normal(kx, (N, c_in2, H, W), jnp.float32)
    params2 = init_params(kp2, c_in2, c_out2, projection=False)
    out2 = jax.block_until_ready(res_unit_block_pallas(x2, params2))
    ref2 = res_unit_block_ref(x2, params2)
    assert out2.shape == (N, c_out2, H, W)
    assert jnp.allclose(out2, ref2, atol=5e-2, rtol=5e-2), "identity-block mismatch"

    print("KERNEL_OK")
</pallas_src>

<mosaic_0001>
module attributes {stable_mosaic.version = 11 : i64} {
  func.func @kernel(%arg0: i32, %arg1: memref<1x16x64xf32, #tpu.memory_space<vmem>>, %arg2: memref<1x64xf32, #tpu.memory_space<vmem>>, %arg3: memref<1x64xf32, #tpu.memory_space<vmem>>, %arg4: memref<3x64x128xbf16, #tpu.memory_space<vmem>>, %arg5: memref<1x128xf32, #tpu.memory_space<vmem>>, %arg6: memref<1x128xf32, #tpu.memory_space<vmem>>, %arg7: memref<3x128x128xbf16, #tpu.memory_space<vmem>>, %arg8: memref<64x128xbf16, #tpu.memory_space<vmem>>, %arg9: memref<1x16x128xf32, #tpu.memory_space<vmem>>, %arg10: memref<18x64xf32, #tpu.memory_space<vmem>>, %arg11: memref<18x128xf32, #tpu.memory_space<vmem>>) attributes {dimension_semantics = [#tpu.dimension_semantics<parallel>], iteration_bounds = array<i64: 2>, scalar_prefetch = 0 : i64, scratch_operands = 2 : i64, tpu.core_type = #tpu.core_type<tc>, window_params = [{transform_indices = @transform_0, window_bounds = array<i64: 1, 16, 64>}, {pipeline_mode = #tpu.pipeline_mode<synchronous>, transform_indices = @transform_1, window_bounds = array<i64: 1, 64>}, {pipeline_mode = #tpu.pipeline_mode<synchronous>, transform_indices = @transform_2, window_bounds = array<i64: 1, 64>}, {pipeline_mode = #tpu.pipeline_mode<synchronous>, transform_indices = @transform_3, window_bounds = array<i64: 3, 64, 128>}, {pipeline_mode = #tpu.pipeline_mode<synchronous>, transform_indices = @transform_4, window_bounds = array<i64: 1, 128>}, {pipeline_mode = #tpu.pipeline_mode<synchronous>, transform_indices = @transform_5, window_bounds = array<i64: 1, 128>}, {pipeline_mode = #tpu.pipeline_mode<synchronous>, transform_indices = @transform_6, window_bounds = array<i64: 3, 128, 128>}, {pipeline_mode = #tpu.pipeline_mode<synchronous>, transform_indices = @transform_7, window_bounds = array<i64: 64, 128>}, {transform_indices = @transform_8, window_bounds = array<i64: 1, 16, 128>}]} {
    %c0 = arith.constant 0 : index
    %c0_0 = arith.constant 0 : index
    %c0_1 = arith.constant 0 : index
    %0 = vector.load %arg1[%c0, %c0_0, %c0_1] : memref<1x16x64xf32, #tpu.memory_space<vmem>>, vector<1x16x64xf32>
    %1 = vector.shape_cast %0 : vector<1x16x64xf32> to vector<16x64xf32>
    %c0_2 = arith.constant 0 : index
    %c0_3 = arith.constant 0 : index
    %2 = vector.load %arg2[%c0_2, %c0_3] : memref<1x64xf32, #tpu.memory_space<vmem>>, vector<1x64xf32>
    %3 = vector.broadcast %2 : vector<1x64xf32> to vector<16x64xf32>
    %4 = arith.mulf %1, %3 : vector<16x64xf32>
    %c0_4 = arith.constant 0 : index
    %c0_5 = arith.constant 0 : index
    %5 = vector.load %arg3[%c0_4, %c0_5] : memref<1x64xf32, #tpu.memory_space<vmem>>, vector<1x64xf32>
    %6 = vector.broadcast %5 : vector<1x64xf32> to vector<16x64xf32>
    %7 = arith.addf %4, %6 : vector<16x64xf32>
    %cst = arith.constant 0.000000e+00 : f32
    %8 = vector.broadcast %cst : f32 to vector<16x64xf32>
    %9 = arith.maximumf %7, %8 : vector<16x64xf32>
    %10 = arith.truncf %9 : vector<16x64xf32> to vector<16x64xbf16>
    %c0_6 = arith.constant 0 : index
    %c0_7 = arith.constant 0 : index
    %11 = vector.load %arg8[%c0_6, %c0_7] : memref<64x128xbf16, #tpu.memory_space<vmem>>, vector<64x128xbf16>
    %cst_8 = arith.constant dense<0.000000e+00> : vector<16x128xf32>
    %12 = tpu.matmul %10, %11, %cst_8 {dimension_numbers = #tpu.dot_dimension_numbers<[1], [0], [0], [1], [0, 0, 1, 1], [], []>} : vector<16x64xbf16>, vector<64x128xbf16>, vector<16x128xf32> -> vector<16x128xf32>
    %cst_9 = arith.constant 0.000000e+00 : f32
    %13 = vector.broadcast %cst_9 : f32 to vector<1x64xf32>
    %c0_10 = arith.constant 0 : index
    %c0_11 = arith.constant 0 : index
    %14 = vector.load %arg10[%c0_10, %c0_11] : memref<18x64xf32, #tpu.memory_space<vmem>>, vector<1x64xf32>
    tpu.vector_store %arg10[%c0_10, %c0_11], %13 {strides = array<i32>} : memref<18x64xf32, #tpu.memory_space<vmem>>, vector<1x64xf32>,
    %c17 = arith.constant 17 : index
    %c0_12 = arith.constant 0 : index
    %15 = vector.load %arg10[%c17, %c0_12] : memref<18x64xf32, #tpu.memory_space<vmem>>, vector<1x64xf32>
    tpu.vector_store %arg10[%c17, %c0_12], %13 {strides = array<i32>} : memref<18x64xf32, #tpu.memory_space<vmem>>, vector<1x64xf32>,
    %c1 = arith.constant 1 : index
    %c0_13 = arith.constant 0 : index
    %16 = vector.load %arg10[%c1, %c0_13] : memref<18x64xf32, #tpu.memory_space<vmem>>, vector<16x64xf32>
    tpu.vector_store %arg10[%c1, %c0_13], %9 {strides = array<i32>} : memref<18x64xf32, #tpu.memory_space<vmem>>, vector<16x64xf32>,
    %c0_14 = arith.constant 0 : index
    %c0_15 = arith.constant 0 : index
    %17 = vector.load %arg10[%c0_14, %c0_15] : memref<18x64xf32, #tpu.memory_space<vmem>>, vector<16x64xf32>
    %18 = arith.truncf %17 : vector<16x64xf32> to vector<16x64xbf16>
    %c0_16 = arith.constant 0 : index
    %c0_17 = arith.constant 0 : index
    %c0_18 = arith.constant 0 : index
    %19 = vector.load %arg4[%c0_16, %c0_17, %c0_18] : memref<3x64x128xbf16, #tpu.memory_space<vmem>>, vector<1x64x128xbf16>
    %20 = vector.shape_cast %19 : vector<1x64x128xbf16> to vector<64x128xbf16>
    %cst_19 = arith.constant dense<0.000000e+00> : vector<16x128xf32>
    %21 = tpu.matmul %18, %20, %cst_19 {dimension_numbers = #tpu.dot_dimension_numbers<[1], [0], [0], [1], [0, 0, 1, 1], [], []>} : vector<16x64xbf16>, vector<64x128xbf16>, vector<16x128xf32> -> vector<16x128xf32>
    %c1_20 = arith.constant 1 : index
    %c0_21 = arith.constant 0 : index
    %22 = vector.load %arg10[%c1_20, %c0_21] : memref<18x64xf32, #tpu.memory_space<vmem>>, vector<16x64xf32>
    %23 = arith.truncf %22 : vector<16x64xf32> to vector<16x64xbf16>
    %c1_22 = arith.constant 1 : index
    %c0_23 = arith.constant 0 : index
    %c0_24 = arith.constant 0 : index
    %24 = vector.load %arg4[%c1_22, %c0_23, %c0_24] : memref<3x64x128xbf16, #tpu.memory_space<vmem>>, vector<1x64x128xbf16>
    %25 = vector.shape_cast %24 : vector<1x64x128xbf16> to vector<64x128xbf16>
    %cst_25 = arith.constant dense<0.000000e+00> : vector<16x128xf32>
    %26 = tpu.matmul %23, %25, %cst_25 {dimension_numbers = #tpu.dot_dimension_numbers<[1], [0], [0], [1], [0, 0, 1, 1], [], []>} : vector<16x64xbf16>, vector<64x128xbf16>, vector<16x128xf32> -> vector<16x128xf32>
    %27 = arith.addf %21, %26 : vector<16x128xf32>
    %c2 = arith.constant 2 : index
    %c0_26 = arith.constant 0 : index
    %28 = vector.load %arg10[%c2, %c0_26] : memref<18x64xf32, #tpu.memory_space<vmem>>, vector<16x64xf32>
    %29 = arith.truncf %28 : vector<16x64xf32> to vector<16x64xbf16>
    %c2_27 = arith.constant 2 : index
    %c0_28 = arith.constant 0 : index
    %c0_29 = arith.constant 0 : index
    %30 = vector.load %arg4[%c2_27, %c0_28, %c0_29] : memref<3x64x128xbf16, #tpu.memory_space<vmem>>, vector<1x64x128xbf16>
    %31 = vector.shape_cast %30 : vector<1x64x128xbf16> to vector<64x128xbf16>
    %cst_30 = arith.constant dense<0.000000e+00> : vector<16x128xf32>
    %32 = tpu.matmul %29, %31, %cst_30 {dimension_numbers = #tpu.dot_dimension_numbers<[1], [0], [0], [1], [0, 0, 1, 1], [], []>} : vector<16x64xbf16>, vector<64x128xbf16>, vector<16x128xf32> -> vector<16x128xf32>
    %33 = arith.addf %27, %32 : vector<16x128xf32>
    %c0_31 = arith.constant 0 : index
    %c0_32 = arith.constant 0 : index
    %34 = vector.load %arg5[%c0_31, %c0_32] : memref<1x128xf32, #tpu.memory_space<vmem>>, vector<1x128xf32>
    %35 = vector.broadcast %34 : vector<1x128xf32> to vector<16x128xf32>
    %36 = arith.mulf %33, %35 : vector<16x128xf32>
    %c0_33 = arith.constant 0 : index
    %c0_34 = arith.constant 0 : index
    %37 = vector.load %arg6[%c0_33, %c0_34] : memref<1x128xf32, #tpu.memory_space<vmem>>, vector<1x128xf32>
    %38 = vector.broadcast %37 : vector<1x128xf32> to vector<16x128xf32>
    %39 = arith.addf %36, %38 : vector<16x128xf32>
    %cst_35 = arith.constant 0.000000e+00 : f32
    %40 = vector.broadcast %cst_35 : f32 to vector<16x128xf32>
    %41 = arith.maximumf %39, %40 : vector<16x128xf32>
    %cst_36 = arith.constant 0.000000e+00 : f32
    %42 = vector.broadcast %cst_36 : f32 to vector<1x128xf32>
    %c0_37 = arith.constant 0 : index
    %c0_38 = arith.constant 0 : index
    %43 = vector.load %arg11[%c0_37, %c0_38] : memref<18x128xf32, #tpu.memory_space<vmem>>, vector<1x128xf32>
    tpu.vector_store %arg11[%c0_37, %c0_38], %42 {strides = array<i32>} : memref<18x128xf32, #tpu.memory_space<vmem>>, vector<1x128xf32>,
    %c17_39 = arith.constant 17 : index
    %c0_40 = arith.constant 0 : index
    %44 = vector.load %arg11[%c17_39, %c0_40] : memref<18x128xf32, #tpu.memory_space<vmem>>, vector<1x128xf32>
    tpu.vector_store %arg11[%c17_39, %c0_40], %42 {strides = array<i32>} : memref<18x128xf32, #tpu.memory_space<vmem>>, vector<1x128xf32>,
    %c1_41 = arith.constant 1 : index
    %c0_42 = arith.constant 0 : index
    %45 = vector.load %arg11[%c1_41, %c0_42] : memref<18x128xf32, #tpu.memory_space<vmem>>, vector<16x128xf32>
    tpu.vector_store %arg11[%c1_41, %c0_42], %41 {strides = array<i32>} : memref<18x128xf32, #tpu.memory_space<vmem>>, vector<16x128xf32>,
    %c0_43 = arith.constant 0 : index
    %c0_44 = arith.constant 0 : index
    %46 = vector.load %arg11[%c0_43, %c0_44] : memref<18x128xf32, #tpu.memory_space<vmem>>, vector<16x128xf32>
    %47 = arith.truncf %46 : vector<16x128xf32> to vector<16x128xbf16>
    %c0_45 = arith.constant 0 : index
    %c0_46 = arith.constant 0 : index
    %c0_47 = arith.constant 0 : index
    %48 = vector.load %arg7[%c0_45, %c0_46, %c0_47] : memref<3x128x128xbf16, #tpu.memory_space<vmem>>, vector<1x128x128xbf16>
    %49 = vector.shape_cast %48 : vector<1x128x128xbf16> to vector<128x128xbf16>
    %cst_48 = arith.constant dense<0.000000e+00> : vector<16x128xf32>
    %50 = tpu.matmul %47, %49, %cst_48 {dimension_numbers = #tpu.dot_dimension_numbers<[1], [0], [0], [1], [0, 0, 1, 1], [], []>} : vector<16x128xbf16>, vector<128x128xbf16>, vector<16x128xf32> -> vector<16x128xf32>
    %51 = arith.addf %12, %50 : vector<16x128xf32>
    %c1_49 = arith.constant 1 : index
    %c0_50 = arith.constant 0 : index
    %52 = vector.load %arg11[%c1_49, %c0_50] : memref<18x128xf32, #tpu.memory_space<vmem>>, vector<16x128xf32>
    %53 = arith.truncf %52 : vector<16x128xf32> to vector<16x128xbf16>
    %c1_51 = arith.constant 1 : index
    %c0_52 = arith.constant 0 : index
    %c0_53 = arith.constant 0 : index
    %54 = vector.load %arg7[%c1_51, %c0_52, %c0_53] : memref<3x128x128xbf16, #tpu.memory_space<vmem>>, vector<1x128x128xbf16>
    %55 = vector.shape_cast %54 : vector<1x128x128xbf16> to vector<128x128xbf16>
    %cst_54 = arith.constant dense<0.000000e+00> : vector<16x128xf32>
    %56 = tpu.matmul %53, %55, %cst_54 {dimension_numbers = #tpu.dot_dimension_numbers<[1], [0], [0], [1], [0, 0, 1, 1], [], []>} : vector<16x128xbf16>, vector<128x128xbf16>, vector<16x128xf32> -> vector<16x128xf32>
    %57 = arith.addf %51, %56 : vector<16x128xf32>
    %c2_55 = arith.constant 2 : index
    %c0_56 = arith.constant 0 : index
    %58 = vector.load %arg11[%c2_55, %c0_56] : memref<18x128xf32, #tpu.memory_space<vmem>>, vector<16x128xf32>
    %59 = arith.truncf %58 : vector<16x128xf32> to vector<16x128xbf16>
    %c2_57 = arith.constant 2 : index
    %c0_58 = arith.constant 0 : index
    %c0_59 = arith.constant 0 : index
    %60 = vector.load %arg7[%c2_57, %c0_58, %c0_59] : memref<3x128x128xbf16, #tpu.memory_space<vmem>>, vector<1x128x128xbf16>
    %61 = vector.shape_cast %60 : vector<1x128x128xbf16> to vector<128x128xbf16>
    %cst_60 = arith.constant dense<0.000000e+00> : vector<16x128xf32>
    %62 = tpu.matmul %59, %61, %cst_60 {dimension_numbers = #tpu.dot_dimension_numbers<[1], [0], [0], [1], [0, 0, 1, 1], [], []>} : vector<16x128xbf16>, vector<128x128xbf16>, vector<16x128xf32> -> vector<16x128xf32>
    %63 = arith.addf %57, %62 : vector<16x128xf32>
    %c0_61 = arith.constant 0 : index
    %c0_62 = arith.constant 0 : index
    %c0_63 = arith.constant 0 : index
    %64 = vector.load %arg9[%c0_61, %c0_62, %c0_63] : memref<1x16x128xf32, #tpu.memory_space<vmem>>, vector<1x16x128xf32>
    %65 = vector.shape_cast %64 : vector<1x16x128xf32> to vector<16x128xf32>
    %66 = vector.shape_cast %63 : vector<16x128xf32> to vector<1x16x128xf32>
    tpu.vector_store %arg9[%c0_61, %c0_62, %c0_63], %66 {strides = array<i32>} : memref<1x16x128xf32, #tpu.memory_space<vmem>>, vector<1x16x128xf32>,
    return
  }
  func.func @transform_0(%arg0: i32) -> (i32, i32, i32) {
    %c0_i32 = arith.constant 0 : i32
    %c0_i32_0 = arith.constant 0 : i32
    %c0_i32_1 = arith.constant 0 : i32
    return %arg0, %c0_i32, %c0_i32_0 : i32, i32, i32
  }
  func.func @transform_1(%arg0: i32) -> (i32, i32) {
    %c0_i32 = arith.constant 0 : i32
    %c0_i32_0 = arith.constant 0 : i32
    %c0_i32_1 = arith.constant 0 : i32
    return %c0_i32, %c0_i32_0 : i32, i32
  }
  func.func @transform_2(%arg0: i32) -> (i32, i32) {
    %c0_i32 = arith.constant 0 : i32
    %c0_i32_0 = arith.constant 0 : i32
    %c0_i32_1 = arith.constant 0 : i32
    return %c0_i32, %c0_i32_0 : i32, i32
  }
  func.func @transform_3(%arg0: i32) -> (i32, i32, i32) {
    %c0_i32 = arith.constant 0 : i32
    %c0_i32_0 = arith.constant 0 : i32
    %c0_i32_1 = arith.constant 0 : i32
    %c0_i32_2 = arith.constant 0 : i32
    return %c0_i32, %c0_i32_0, %c0_i32_1 : i32, i32, i32
  }
  func.func @transform_4(%arg0: i32) -> (i32, i32) {
    %c0_i32 = arith.constant 0 : i32
    %c0_i32_0 = arith.constant 0 : i32
    %c0_i32_1 = arith.constant 0 : i32
    return %c0_i32, %c0_i32_0 : i32, i32
  }
  func.func @transform_5(%arg0: i32) -> (i32, i32) {
    %c0_i32 = arith.constant 0 : i32
    %c0_i32_0 = arith.constant 0 : i32
    %c0_i32_1 = arith.constant 0 : i32
    return %c0_i32, %c0_i32_0 : i32, i32
  }
  func.func @transform_6(%arg0: i32) -> (i32, i32, i32) {
    %c0_i32 = arith.constant 0 : i32
    %c0_i32_0 = arith.constant 0 : i32
    %c0_i32_1 = arith.constant 0 : i32
    %c0_i32_2 = arith.constant 0 : i32
    return %c0_i32, %c0_i32_0, %c0_i32_1 : i32, i32, i32
  }
  func.func @transform_7(%arg0: i32) -> (i32, i32) {
    %c0_i32 = arith.constant 0 : i32
    %c0_i32_0 = arith.constant 0 : i32
    %c0_i32_1 = arith.constant 0 : i32
    return %c0_i32, %c0_i32_0 : i32, i32
  }
  func.func @transform_8(%arg0: i32) -> (i32, i32, i32) {
    %c0_i32 = arith.constant 0 : i32
    %c0_i32_0 = arith.constant 0 : i32
    %c0_i32_1 = arith.constant 0 : i32
    return %arg0, %c0_i32, %c0_i32_0 : i32, i32, i32
  }
}

</mosaic_0001>

<llo_original>
// kernel: tpu_custom_call.1
$region0: #{tpu_custom_call.1}
  #allocation0 [shape = 'u32[]', space=smem, size = 0x4, offset = 0x4, fixed_abs, tag = 'smem constant byte address 0x4 - core index']
  #allocation1 [shape = 'u32[72,128]{1,0:T(1,128)}', space=vmem, size = 0x9000, scoped, tag = 'internal scratch']
  #allocation2 [shape = 'f32[18,64]{1,0:T(8,128)}', space=vmem, size = 0x3000, scoped, tag = 'scratch operand']
  #allocation3 [shape = 'f32[18,128]{1,0:T(8,128)}', space=vmem, size = 0x3000, scoped, tag = 'scratch operand']
  %s0 = inlined_call_operand.hbm [shape: f32[2,16,64], index: 0, kind: input, shape index: {}]
  %s1 = inlined_call_operand.hbm [shape: f32[1,64], index: 1, kind: input, shape index: {}]
  %s2 = inlined_call_operand.vmem [shape: f32[1,64], index: 2, kind: input, shape index: {}]
  %s3 = inlined_call_operand.hbm [shape: bf16[3,64,128], index: 3, kind: input, shape index: {}]
  %s4 = inlined_call_operand.vmem [shape: f32[1,128], index: 4, kind: input, shape index: {}]
  %s5 = inlined_call_operand.vmem [shape: f32[1,128], index: 5, kind: input, shape index: {}]
  %s6 = inlined_call_operand.hbm [shape: bf16[3,128,128], index: 6, kind: input, shape index: {}]
  %s7 = inlined_call_operand.hbm [shape: bf16[64,128], index: 7, kind: input, shape index: {}]
  %s8 = inlined_call_operand.hbm [shape: f32[2,16,128], index: 8, kind: output, shape index: {}]
  %s9 = sld [smem:[#allocation0]]
  $region85: #{tpu_custom_call.1} parent=0
    _
  %s11 = ssub.s32 1, %s9
  %s12 = scalar_select 0, %s11, %s9
  $region1: #{tpu_custom_call.1} parent=0
    #allocation4 [shape = 'u8[16384]{0}', space=vmem, size = 0x4000, scoped, tag = 'input window, operand 0']
    #allocation5 [shape = 's32[2]{0}', space=sflag, size = 0x8, scoped, tag = 'scoped memory for tpu_custom_call.1']
    #allocation6 [shape = 's32[2]{0}', space=sflag, size = 0x8, scoped, tag = 'scoped memory for tpu_custom_call.1']
    #allocation7 [shape = 'u8[512]{0}', space=vmem, size = 0x400, scoped, tag = 'input window, operand 1, single buffered']
    #allocation8 [shape = 's32[1]{0}', space=sflag, size = 0x4, scoped, tag = 'scoped memory for tpu_custom_call.1']
    #allocation9 [shape = 'u8[49152]{0}', space=vmem, size = 0xc000, scoped, tag = 'input window, operand 3, single buffered']
    #allocation10 [shape = 'u8[98304]{0}', space=vmem, size = 0x18000, scoped, tag = 'input window, operand 6, single buffered']
    #allocation11 [shape = 's32[1]{0}', space=sflag, size = 0x4, scoped, tag = 'scoped memory for tpu_custom_call.1']
    #allocation12 [shape = 'u8[16384]{0}', space=vmem, size = 0x4000, scoped, tag = 'input window, operand 7, single buffered']
    #allocation13 [shape = 'u8[16384]{0}', space=vmem, size = 0x4000, scoped, tag = 'output window, operand 0']
    %13 = vsyncpa [#allocation5], 0
    %s14 = scalar_lea.sflag [#allocation5], 1
    %15 = vsyncpa %s14, 0
    %16 = vsyncpa [#allocation8], 0
    %17 = vsyncpa [#allocation11], 0
    %18 = vsyncpa [#allocation6], 0
    %s19 = scalar_lea.sflag [#allocation6], 1
    %20 = vsyncpa %s19, 0
    loop: start=0, step=1, limit=4
    $region2: #{tpu_custom_call.1} parent=1 // loop_pre_header
      _
    $region3: #{tpu_custom_call.1} parent=1 // loop_header
      %s22 = sphi 0, %s26
      %p23 = scmp.ge.s32.totalorder %s22, 4
      %s32 = sphi 0, %s34
      %s35 = sphi 0, %s32
      %s36 = sphi 0, %s35
      %s52 = sphi 0, %s36
      %s56 = sphi 0, %s56
      %s58 = sphi 0, %s56
      %s59 = sphi 0, %s58
      %s73 = sphi 0, %s59
      %s77 = sphi 0, %s77
      %s79 = sphi 0, %s77
      %s80 = sphi 0, %s79
      %s94 = sphi 0, %s80
      %s98 = sphi 0, %s98
      %s100 = sphi 0, %s98
      %s101 = sphi 0, %s100
      %s115 = sphi 0, %s101
      %s119 = sphi 0, %s119
      %s121 = sphi 0, %s119
      %s122 = sphi 0, %s121
      %s136 = sphi 0, %s122
      %s140 = sphi 0, %s140
      %s142 = sphi 0, %s140
      %s143 = sphi 0, %s142
      %s157 = sphi 0, %s143
      %s161 = sphi 0, %s161
      %s163 = sphi 0, %s161
      %s164 = sphi 0, %s163
      %s178 = sphi 0, %s164
      %s182 = sphi 0, %s182
      %s184 = sphi 0, %s182
      %s185 = sphi 0, %s184
      %s199 = sphi 0, %s185
      %s205 = sphi 0, %s207
      %s208 = sphi 0, %s205
      %s209 = sphi 0, %s208
      %s225 = sphi 0, %s209
    $region4: #{tpu_custom_call.1} parent=1 // loop_header_branch
      %25 = sbr.rel (%p23) target = $region8
    $region5: #{tpu_custom_call.1} parent=1 // loop_body
      %s27 = ssub.s32 %s22, 1
      %s28 = ssub.s32 %s22, 2
      %s29 = sadd.s32 %s22, 1
      %s30 = ssub.s32 %s22, %s29
      %p31 = scmp.eq.s32.totalorder %s30, 0
      %s33 = sadd.s32 %s32, 1
      %s34 = scalar_select %p31, %s32, %s33
      %p37 = pneg %p31
      %p38 = scmp.eq.s32.totalorder %s22, 1
      %p39 = por %p37, %p38
      %p40 = scmp.ne.s32.totalorder %s32, %s35
      %p41 = scmp.eq.s32.totalorder %s22, 0
      %p42 = por %p40, %p41
      %p43 = scmp.ne.s32.totalorder %s32, %s35
      %p44 = scmp.eq.s32.totalorder %s27, 1
      %p45 = por %p43, %p44
      %p46 = scmp.ne.s32.totalorder %s35, %s36
      %p47 = scmp.eq.s32.totalorder %s27, 0
      %p48 = por %p46, %p47
      %p49 = scmp.ne.s32.totalorder %s35, %s36
      %p50 = scmp.eq.s32.totalorder %s28, 1
      %p51 = por %p49, %p50
      %p53 = scmp.ne.s32.totalorder %s36, %s52
      %p54 = scmp.eq.s32.totalorder %s28, 0
      %p55 = por %p53, %p54
      %s57 = sadd.s32 %s56, 1
      %p60 = scmp.eq.s32.totalorder %s22, 1
      %p61 = scmp.ne.s32.totalorder %s56, %s58
      %p62 = scmp.eq.s32.totalorder %s22, 0
      %p63 = por %p61, %p62
      %p64 = scmp.ne.s32.totalorder %s56, %s58
      %p65 = scmp.eq.s32.totalorder %s27, 1
      %p66 = por %p64, %p65
      %p67 = scmp.ne.s32.totalorder %s58, %s59
      %p68 = scmp.eq.s32.totalorder %s27, 0
      %p69 = por %p67, %p68
      %p70 = scmp.ne.s32.totalorder %s58, %s59
      %p71 = scmp.eq.s32.totalorder %s28, 1
      %p72 = por %p70, %p71
      %p74 = scmp.ne.s32.totalorder %s59, %s73
      %p75 = scmp.eq.s32.totalorder %s28, 0
      %p76 = por %p74, %p75
      %s78 = sadd.s32 %s77, 1
      %p81 = scmp.eq.s32.totalorder %s22, 1
      %p82 = scmp.ne.s32.totalorder %s77, %s79
      %p83 = scmp.eq.s32.totalorder %s22, 0
      %p84 = por %p82, %p83
      %p85 = scmp.ne.s32.totalorder %s77, %s79
      %p86 = scmp.eq.s32.totalorder %s27, 1
      %p87 = por %p85, %p86
      %p88 = scmp.ne.s32.totalorder %s79, %s80
      %p89 = scmp.eq.s32.totalorder %s27, 0
      %p90 = por %p88, %p89
      %p91 = scmp.ne.s32.totalorder %s79, %s80
      %p92 = scmp.eq.s32.totalorder %s28, 1
      %p93 = por %p91, %p92
      %p95 = scmp.ne.s32.totalorder %s80, %s94
      %p96 = scmp.eq.s32.totalorder %s28, 0
      %p97 = por %p95, %p96
      %s99 = sadd.s32 %s98, 1
      %p102 = scmp.eq.s32.totalorder %s22, 1
      %p103 = scmp.ne.s32.totalorder %s98, %s100
      %p104 = scmp.eq.s32.totalorder %s22, 0
      %p105 = por %p103, %p104
      %p106 = scmp.ne.s32.totalorder %s98, %s100
      %p107 = scmp.eq.s32.totalorder %s27, 1
      %p108 = por %p106, %p107
      %p109 = scmp.ne.s32.totalorder %s100, %s101
      %p110 = scmp.eq.s32.totalorder %s27, 0
      %p111 = por %p109, %p110
      %p112 = scmp.ne.s32.totalorder %s100, %s101
      %p113 = scmp.eq.s32.totalorder %s28, 1
      %p114 = por %p112, %p113
      %p116 = scmp.ne.s32.totalorder %s101, %s115
      %p117 = scmp.eq.s32.totalorder %s28, 0
      %p118 = por %p116, %p117
      %s120 = sadd.s32 %s119, 1
      %p123 = scmp.eq.s32.totalorder %s22, 1
      %p124 = scmp.ne.s32.totalorder %s119, %s121
      %p125 = scmp.eq.s32.totalorder %s22, 0
      %p126 = por %p124, %p125
      %p127 = scmp.ne.s32.totalorder %s119, %s121
      %p128 = scmp.eq.s32.totalorder %s27, 1
      %p129 = por %p127, %p128
      %p130 = scmp.ne.s32.totalorder %s121, %s122
      %p131 = scmp.eq.s32.totalorder %s27, 0
      %p132 = por %p130, %p131
      %p133 = scmp.ne.s32.totalorder %s121, %s122
      %p134 = scmp.eq.s32.totalorder %s28, 1
      %p135 = por %p133, %p134
      %p137 = scmp.ne.s32.totalorder %s122, %s136
      %p138 = scmp.eq.s32.totalorder %s28, 0
      %p139 = por %p137, %p138
      %s141 = sadd.s32 %s140, 1
      %p144 = scmp.eq.s32.totalorder %s22, 1
      %p145 = scmp.ne.s32.totalorder %s140, %s142
      %p146 = scmp.eq.s32.totalorder %s22, 0
      %p147 = por %p145, %p146
      %p148 = scmp.ne.s32.totalorder %s140, %s142
      %p149 = scmp.eq.s32.totalorder %s27, 1
      %p150 = por %p148, %p149
      %p151 = scmp.ne.s32.totalorder %s142, %s143
      %p152 = scmp.eq.s32.totalorder %s27, 0
      %p153 = por %p151, %p152
      %p154 = scmp.ne.s32.totalorder %s142, %s143
      %p155 = scmp.eq.s32.totalorder %s28, 1
      %p156 = por %p154, %p155
      %p158 = scmp.ne.s32.totalorder %s143, %s157
      %p159 = scmp.eq.s32.totalorder %s28, 0
      %p160 = por %p158, %p159
      %s162 = sadd.s32 %s161, 1
      %p165 = scmp.eq.s32.totalorder %s22, 1
      %p166 = scmp.ne.s32.totalorder %s161, %s163
      %p167 = scmp.eq.s32.totalorder %s22, 0
      %p168 = por %p166, %p167
      %p169 = scmp.ne.s32.totalorder %s161, %s163
      %p170 = scmp.eq.s32.totalorder %s27, 1
      %p171 = por %p169, %p170
      %p172 = scmp.ne.s32.totalorder %s163, %s164
      %p173 = scmp.eq.s32.totalorder %s27, 0
      %p174 = por %p172, %p173
      %p175 = scmp.ne.s32.totalorder %s163, %s164
      %p176 = scmp.eq.s32.totalorder %s28, 1
      %p177 = por %p175, %p176
      %p179 = scmp.ne.s32.totalorder %s164, %s178
      %p180 = scmp.eq.s32.totalorder %s28, 0
      %p181 = por %p179, %p180
      %s183 = sadd.s32 %s182, 1
      %p186 = scmp.eq.s32.totalorder %s22, 1
      %p187 = scmp.ne.s32.totalorder %s182, %s184
      %p188 = scmp.eq.s32.totalorder %s22, 0
      %p189 = por %p187, %p188
      %p190 = scmp.ne.s32.totalorder %s182, %s184
      %p191 = scmp.eq.s32.totalorder %s27, 1
      %p192 = por %p190, %p191
      %p193 = scmp.ne.s32.totalorder %s184, %s185
      %p194 = scmp.eq.s32.totalorder %s27, 0
      %p195 = por %p193, %p194
      %p196 = scmp.ne.s32.totalorder %s184, %s185
      %p197 = scmp.eq.s32.totalorder %s28, 1
      %p198 = por %p196, %p197
      %p200 = scmp.ne.s32.totalorder %s185, %s199
      %p201 = scmp.eq.s32.totalorder %s28, 0
      %p202 = por %p200, %p201
      %s203 = ssub.s32 %s22, %s29
      %p204 = scmp.eq.s32.totalorder %s203, 0
      %s206 = sadd.s32 %s205, 1
      %s207 = scalar_select %p204, %s205, %s206
      %p210 = pneg %p204
      %p211 = scmp.eq.s32.totalorder %s22, 1
      %p212 = por %p210, %p211
      %p213 = scmp.ne.s32.totalorder %s205, %s208
      %p214 = scmp.eq.s32.totalorder %s22, 0
      %p215 = por %p213, %p214
      %p216 = scmp.ne.s32.totalorder %s205, %s208
      %p217 = scmp.eq.s32.totalorder %s27, 1
      %p218 = por %p216, %p217
      %p219 = scmp.ne.s32.totalorder %s208, %s209
      %p220 = scmp.eq.s32.totalorder %s27, 0
      %p221 = por %p219, %p220
      %p222 = scmp.ne.s32.totalorder %s208, %s209
      %p223 = scmp.eq.s32.totalorder %s28, 1
      %p224 = por %p222, %p223
      %p226 = scmp.ne.s32.totalorder %s209, %s225
      %p227 = scmp.eq.s32.totalorder %s28, 0
      %p228 = por %p226, %p227
      %p229 = scmp.le.s32.totalorder 1, %s22
      %p230 = scmp.lt.s32.totalorder %s22, 3
      %p231 = pnand %p229, %p230
      %p232 = pneg %p231
      // Predicated region
      $region9: #{tpu_custom_call.1} parent=5 // pred_check
        _
      $region10: #{tpu_custom_call.1} parent=5 // pred_check_branch
        %234 = sbr.rel (%p231) target = $region12
      $region11: #{tpu_custom_call.1} parent=5 // pred_region
        %s235 = ssub.s32 %s22, 1
        // Predicated region
        $region13: #{tpu_custom_call.1} parent=11 // pred_check
          %p236 = pneg %p69
        $region14: #{tpu_custom_call.1} parent=11 // pred_check_branch
          %238 = sbr.rel (%p236) target = $region16
        $region15: #{tpu_custom_call.1} parent=11 // pred_region
          %240 = vsyncadd [#allocation8], 0
          %s242 = sshll.u32 %s1, 4
          %s243 = int_to_ptr.hbm [resolvable:$true] %s242
          %s244 = sshll.u32 [#allocation7], 4
          %s245 = int_to_ptr.vmem [resolvable:$true] %s244
          %247 = dma.hbm_to_vmem [thread:$0]  %s243, 16, %s245, [#allocation8]
        $region16: #{tpu_custom_call.1} parent=11 // pred_fallthru
          _
        // Predicated region
        $region17: #{tpu_custom_call.1} parent=11 // pred_check
          %p248 = pneg %p90
        $region18: #{tpu_custom_call.1} parent=11 // pred_check_branch
          %250 = sbr.rel (%p248) target = $region20
        $region19: #{tpu_custom_call.1} parent=11 // pred_region
          _
        $region20: #{tpu_custom_call.1} parent=11 // pred_fallthru
          _
        // Predicated region
        $region21: #{tpu_custom_call.1} parent=11 // pred_check
          %p251 = pneg %p111
        $region22: #{tpu_custom_call.1} parent=11 // pred_check_branch
          %253 = sbr.rel (%p251) target = $region24
        $region23: #{tpu_custom_call.1} parent=11 // pred_region
          %255 = vsyncadd [#allocation8], 0
          %s256 = sshll.u32 %s3, 4
          %s257 = int_to_ptr.hbm [resolvable:$true] %s256
          %s258 = sshll.u32 [#allocation9], 4
          %s259 = int_to_ptr.vmem [resolvable:$true] %s258
          %264 = dma.hbm_to_vmem [thread:$0]  %s257, 1536, %s259, [#allocation8], 64, 64, 4
        $region24: #{tpu_custom_call.1} parent=11 // pred_fallthru
          _
        // Predicated region
        $region25: #{tpu_custom_call.1} parent=11 // pred_check
          %p265 = pneg %p132
        $region26: #{tpu_custom_call.1} parent=11 // pred_check_branch
          %267 = sbr.rel (%p265) target = $region28
        $region27: #{tpu_custom_call.1} parent=11 // pred_region
          _
        $region28: #{tpu_custom_call.1} parent=11 // pred_fallthru
          _
        // Predicated region
        $region29: #{tpu_custom_call.1} parent=11 // pred_check
          %p268 = pneg %p153
        $region30: #{tpu_custom_call.1} parent=11 // pred_check_branch
          %270 = sbr.rel (%p268) target = $region32
        $region31: #{tpu_custom_call.1} parent=11 // pred_region
          _
        $region32: #{tpu_custom_call.1} parent=11 // pred_fallthru
          _
        // Predicated region
        $region33: #{tpu_custom_call.1} parent=11 // pred_check
          %p271 = pneg %p174
        $region34: #{tpu_custom_call.1} parent=11 // pred_check_branch
          %273 = sbr.rel (%p271) target = $region36
        $region35: #{tpu_custom_call.1} parent=11 // pred_region
          %275 = vsyncadd [#allocation11], 0
          %s276 = sshll.u32 %s6, 4
          %s277 = int_to_ptr.hbm [resolvable:$true] %s276
          %s278 = sshll.u32 [#allocation10], 4
          %s279 = int_to_ptr.vmem [resolvable:$true] %s278
          %284 = dma.hbm_to_vmem [thread:$0]  %s277, 3072, %s279, [#allocation11], 64, 64, 4
        $region36: #{tpu_custom_call.1} parent=11 // pred_fallthru
          _
        // Predicated region
        $region37: #{tpu_custom_call.1} parent=11 // pred_check
          %p285 = pneg %p195
        $region38: #{tpu_custom_call.1} parent=11 // pred_check_branch
          %287 = sbr.rel (%p285) target = $region40
        $region39: #{tpu_custom_call.1} parent=11 // pred_region
          %289 = vsyncadd [#allocation11], 0
          %s290 = sshll.u32 %s7, 4
          %s291 = int_to_ptr.hbm [resolvable:$true] %s290
          %s292 = sshll.u32 [#allocation12], 4
          %s293 = int_to_ptr.vmem [resolvable:$true] %s292
          %298 = dma.hbm_to_vmem [thread:$0]  %s291, 512, %s293, [#allocation11], 64, 64, 4
        $region40: #{tpu_custom_call.1} parent=11 // pred_fallthru
          _
      $region12: #{tpu_custom_call.1} parent=5 // pred_fallthru
        _
      %p299 = scmp.lt.s32.totalorder %s22, 2
      // Predicated region
      $region41: #{tpu_custom_call.1} parent=5 // pred_check
        %p300 = pneg %p299
      $region42: #{tpu_custom_call.1} parent=5 // pred_check_branch
        %302 = sbr.rel (%p300) target = $region44
      $region43: #{tpu_custom_call.1} parent=5 // pred_region
        // Predicated region
        $region45: #{tpu_custom_call.1} parent=43 // pred_check
          %p303 = pneg %p42
        $region46: #{tpu_custom_call.1} parent=43 // pred_check_branch
          %305 = sbr.rel (%p303) target = $region48
        $region47: #{tpu_custom_call.1} parent=43 // pred_region
          %s306 = sand.u32 %s32, 1
          %s307 = scalar_lea.sflag [#allocation5], %s306
          %s308 = sand.u32 %s32, 1
          %s309 = smul.addr %s308, 16
          %s310 = scalar_lea.vmem [#allocation4], %s309
          %312 = vsyncadd %s307, 0
          %s313 = smul.addr %s22, 2
          %s314 = smul.addr %s313, 8
          %s315 = scalar_lea.hbm %s0, %s314
          %s316 = sshll.u32 %s315, 4
          %s317 = int_to_ptr.hbm [resolvable:$true] %s316
          %s318 = sshll.u32 %s310, 4
          %s319 = int_to_ptr.vmem [resolvable:$true] %s318
          %324 = dma.hbm_to_vmem [thread:$0]  %s317, 256, %s319, %s307, 128, 128, 8
        $region48: #{tpu_custom_call.1} parent=43 // pred_fallthru
          _
      $region44: #{tpu_custom_call.1} parent=5 // pred_fallthru
        _
      %p325 = scmp.le.s32.totalorder 1, %s22
      %p326 = scmp.lt.s32.totalorder %s22, 3
      %p327 = pnand %p325, %p326
      %p328 = pneg %p327
      // Predicated region
      $region49: #{tpu_custom_call.1} parent=5 // pred_check
        _
      $region50: #{tpu_custom_call.1} parent=5 // pred_check_branch
        %330 = sbr.rel (%p327) target = $region52
      $region51: #{tpu_custom_call.1} parent=5 // pred_region
        %s331 = ssub.s32 %s22, 1
        %s332 = sand.u32 %s35, 1
        %s333 = scalar_lea.sflag [#allocation5], %s332
        %s334 = sand.u32 %s35, 1
        %s335 = smul.addr %s334, 16
        %s336 = scalar_lea.vmem [#allocation4], %s335
        // Predicated region
        $region53: #{tpu_custom_call.1} parent=51 // pred_check
          %p337 = pneg %p48
        $region54: #{tpu_custom_call.1} parent=51 // pred_check_branch
          %339 = sbr.rel (%p337) target = $region56
        $region55: #{tpu_custom_call.1} parent=51 // pred_region
          %341 = dma.done %s333, 256
        $region56: #{tpu_custom_call.1} parent=51 // pred_fallthru
          _
        // Predicated region
        $region57: #{tpu_custom_call.1} parent=51 // pred_check
          %p342 = pneg %p69
        $region58: #{tpu_custom_call.1} parent=51 // pred_check_branch
          %344 = sbr.rel (%p342) target = $region60
        $region59: #{tpu_custom_call.1} parent=51 // pred_region
          %346 = dma.done [#allocation8], 16
        $region60: #{tpu_custom_call.1} parent=51 // pred_fallthru
          _
        // Predicated region
        $region61: #{tpu_custom_call.1} parent=51 // pred_check
          %p347 = pneg %p111
        $region62: #{tpu_custom_call.1} parent=51 // pred_check_branch
          %349 = sbr.rel (%p347) target = $region64
        $region63: #{tpu_custom_call.1} parent=51 // pred_region
          %351 = dma.done [#allocation8], 1536
        $region64: #{tpu_custom_call.1} parent=51 // pred_fallthru
          _
        // Predicated region
        $region65: #{tpu_custom_call.1} parent=51 // pred_check
          %p352 = pneg %p174
        $region66: #{tpu_custom_call.1} parent=51 // pred_check_branch
          %354 = sbr.rel (%p352) target = $region68
        $region67: #{tpu_custom_call.1} parent=51 // pred_region
          %356 = dma.done [#allocation11], 3072
        $region68: #{tpu_custom_call.1} parent=51 // pred_fallthru
          _
        // Predicated region
        $region69: #{tpu_custom_call.1} parent=51 // pred_check
          %p357 = pneg %p195
        $region70: #{tpu_custom_call.1} parent=51 // pred_check_branch
          %359 = sbr.rel (%p357) target = $region72
        $region71: #{tpu_custom_call.1} parent=51 // pred_region
          %361 = dma.done [#allocation11], 512
        $region72: #{tpu_custom_call.1} parent=51 // pred_fallthru
          _
        %s362 = sand.u32 %s35, 1
        %s363 = scalar_lea.sflag [#allocation5], %s362
        %s364 = sand.u32 %s35, 1
        %s365 = smul.addr %s364, 16
        %s366 = scalar_lea.vmem [#allocation4], %s365
        %p367 = pneg %p48
        %p368 = pneg %p45
        %p369 = pneg %p69
        %p370 = pneg %p66
        %p371 = pneg %p90
        %p372 = pneg %p87
        %p373 = pneg %p111
        %p374 = pneg %p108
        %p375 = pneg %p132
        %p376 = pneg %p129
        %p377 = pneg %p153
        %p378 = pneg %p150
        %p379 = pneg %p174
        %p380 = pneg %p171
        %p381 = pneg %p195
        %p382 = pneg %p192
        %p383 = pneg %p221
        %p384 = pneg %p218
        %s385 = sand.u32 %s208, 1
        %s386 = scalar_lea.sflag [#allocation6], %s385
        %s387 = sand.u32 %s208, 1
        %s388 = smul.addr %s387, 16
        %s389 = scalar_lea.vmem [#allocation13], %s388
        %v391 = vld [vmem:[%s336] sm:$0xff]
        %v392 = vld [vmem:[%s336 + $0x8] sm:$0xff]
        %v393 = vld [vmem:[#allocation7] sm:$0x1]
        %v395 = vperm.slane %v393, 0
        %v397 = vmul.f32 %v391, %v395
        %v398 = vmul.f32 %v392, %v395
        %v399 = vld [vmem:[%s2] sm:$0x1]
        %v401 = vperm.slane %v399, 0
        %v403 = vadd.f32 %v397, %v401
        %v404 = vadd.f32 %v398, %v401
        %v405 = vmax.f32 %v403, 0.0
        %v406 = vmax.f32 %v404, 0.0
        %v407 = vpack.c.bf16 %v406, %v405
        %v408 = vld [vmem:[#allocation12] sm:$0xf]
        %v409 = vld [vmem:[#allocation12 + $0x4] sm:$0xf]
        %v410 = vld [vmem:[#allocation12 + $0x8] sm:$0xf]
        %v411 = vld [vmem:[#allocation12 + $0xc] sm:$0xf]
        %v412 = vld [vmem:[#allocation12 + $0x10] sm:$0xf]
        %v413 = vld [vmem:[#allocation12 + $0x14] sm:$0xf]
        %v414 = vld [vmem:[#allocation12 + $0x18] sm:$0xf]
        %v415 = vld [vmem:[#allocation12 + $0x1c] sm:$0xf]
        %vm416 = vcmask 516096
        %417 = vst.msk [vmem:[#allocation2] sm:$0x1] %vm416, 0.0
        %418 = vst.msk [vmem:[#allocation2 + $0x11] sm:$0x1] %vm416, 0.0
        %vm419 = vcmask 523264
        %420 = vst.msk [vmem:[#allocation2 + $0x1] sm:$0xff] %vm419, %v405
        %421 = vst.msk [vmem:[#allocation2 + $0x9] sm:$0xff] %vm419, %v406
        %v422 = vld [vmem:[#allocation2] sm:$0xff]
        %v423 = vld [vmem:[#allocation2 + $0x8] sm:$0xff]
        %v424 = vpack.c.bf16 %v423, %v422
        %v425 = vld [vmem:[#allocation9] sm:$0xf]
        %v426 = vld [vmem:[#allocation9 + $0x4] sm:$0xf]
        %v427 = vld [vmem:[#allocation9 + $0x8] sm:$0xf]
        %v428 = vld [vmem:[#allocation9 + $0xc] sm:$0xf]
        %v429 = vld [vmem:[#allocation9 + $0x10] sm:$0xf]
        %v430 = vld [vmem:[#allocation9 + $0x14] sm:$0xf]
        %v431 = vld [vmem:[#allocation9 + $0x18] sm:$0xf]
        %v432 = vld [vmem:[#allocation9 + $0x1c] sm:$0xf]
        %v433 = vld [vmem:[#allocation2 + $0x1] sm:$0xff]
        %v434 = vld [vmem:[#allocation2 + $0x9] sm:$0xff]
        %v435 = vpack.c.bf16 %v434, %v433
        %s436 = scalar_lea.vmem [#allocation9], 32
        %v437 = vld [vmem:[%s436] sm:$0xf]
        %v438 = vld [vmem:[%s436 + $0x4] sm:$0xf]
        %v439 = vld [vmem:[%s436 + $0x8] sm:$0xf]
        %v440 = vld [vmem:[%s436 + $0xc] sm:$0xf]
        %v441 = vld [vmem:[%s436 + $0x10] sm:$0xf]
        %v442 = vld [vmem:[%s436 + $0x14] sm:$0xf]
        %v443 = vld [vmem:[%s436 + $0x18] sm:$0xf]
        %v444 = vld [vmem:[%s436 + $0x1c] sm:$0xf]
        %v453 = vunpack.c.l.b16 %v437
        %v454 = vunpack.c.l.b16 %v438
        %v455 = vunpack.c.l.b16 %v439
        %v456 = vunpack.c.l.b16 %v440
        %v457 = vunpack.c.l.b16 %v441
        %v458 = vunpack.c.l.b16 %v442
        %v459 = vunpack.c.l.b16 %v443
        %v460 = vunpack.c.l.b16 %v444
        %v461 = vpack.c.b16 %v454, %v453
        %v462 = vpack.c.b16 %v456, %v455
        %v463 = vpack.c.b16 %v458, %v457
        %v464 = vpack.c.b16 %v460, %v459
        %v470 = vsel %vm419, %v435, 0
        %472 = vmatpush.bf16.msra.mxu0 0
        %473 = vmatpush.bf16.msra.mxu0 0
        %474 = vmatpush.bf16.msra.mxu0 0
        %475 = vmatpush.bf16.msra.mxu0 0
        %476 = vmatpush.bf16.msra.mxu0 %v464
        %477 = vmatpush.bf16.msra.mxu0 %v463
        %478 = vmatpush.bf16.msra.mxu0 %v462
        %479 = vmatpush.bf16.msra.mxu0 %v461
        %480 = vmatmul.bf16.gmra.mxu0 %v470
        %v481 = vpop.f32.mrf.mxu0
        %v482 = vadd.f32 0.0, %v481
        %v483 = vpop.f32.mrf.mxu0
        %v484 = vadd.f32 0.0, %v483
        %485 = vdwg.mxu0
        %v494 = vunpack.c.l.b16 %v425
        %v495 = vunpack.c.l.b16 %v426
        %v496 = vunpack.c.l.b16 %v427
        %v497 = vunpack.c.l.b16 %v428
        %v498 = vunpack.c.l.b16 %v429
        %v499 = vunpack.c.l.b16 %v430
        %v500 = vunpack.c.l.b16 %v431
        %v501 = vunpack.c.l.b16 %v432
        %v502 = vpack.c.b16 %v495, %v494
        %v503 = vpack.c.b16 %v497, %v496
        %v504 = vpack.c.b16 %v499, %v498
        %v505 = vpack.c.b16 %v501, %v500
        %v511 = vsel %vm419, %v424, 0
        %513 = vmatpush.bf16.msra.mxu0 0
        %514 = vmatpush.bf16.msra.mxu0 0
        %515 = vmatpush.bf16.msra.mxu0 0
        %516 = vmatpush.bf16.msra.mxu0 0
        %517 = vmatpush.bf16.msra.mxu0 %v505
        %518 = vmatpush.bf16.msra.mxu0 %v504
        %519 = vmatpush.bf16.msra.mxu0 %v503
        %520 = vmatpush.bf16.msra.mxu0 %v502
        %521 = vmatmul.bf16.gmra.mxu0 %v511
        %v522 = vpop.f32.mrf.mxu0
        %v523 = vadd.f32 %v482, %v522
        %v524 = vpop.f32.mrf.mxu0
        %v525 = vadd.f32 %v484, %v524
        %526 = vdwg.mxu0
        %v527 = vld [vmem:[#allocation2 + $0x2] sm:$0xff]
        %v528 = vld [vmem:[#allocation2 + $0xa] sm:$0xff]
        %v529 = vpack.c.bf16 %v528, %v527
        %s530 = scalar_lea.vmem [#allocation9], 64
        %v531 = vld [vmem:[%s530] sm:$0xf]
        %v532 = vld [vmem:[%s530 + $0x4] sm:$0xf]
        %v533 = vld [vmem:[%s530 + $0x8] sm:$0xf]
        %v534 = vld [vmem:[%s530 + $0xc] sm:$0xf]
        %v535 = vld [vmem:[%s530 + $0x10] sm:$0xf]
        %v536 = vld [vmem:[%s530 + $0x14] sm:$0xf]
        %v537 = vld [vmem:[%s530 + $0x18] sm:$0xf]
        %v538 = vld [vmem:[%s530 + $0x1c] sm:$0xf]
        %v547 = vunpack.c.l.b16 %v531
        %v548 = vunpack.c.l.b16 %v532
        %v549 = vunpack.c.l.b16 %v533
        %v550 = vunpack.c.l.b16 %v534
        %v551 = vunpack.c.l.b16 %v535
        %v552 = vunpack.c.l.b16 %v536
        %v553 = vunpack.c.l.b16 %v537
        %v554 = vunpack.c.l.b16 %v538
        %v555 = vpack.c.b16 %v548, %v547
        %v556 = vpack.c.b16 %v550, %v549
        %v557 = vpack.c.b16 %v552, %v551
        %v558 = vpack.c.b16 %v554, %v553
        %v564 = vsel %vm419, %v529, 0
        %566 = vmatpush.bf16.msra.mxu0 0
        %567 = vmatpush.bf16.msra.mxu0 0
        %568 = vmatpush.bf16.msra.mxu0 0
        %569 = vmatpush.bf16.msra.mxu0 0
        %570 = vmatpush.bf16.msra.mxu0 %v558
        %571 = vmatpush.bf16.msra.mxu0 %v557
        %572 = vmatpush.bf16.msra.mxu0 %v556
        %573 = vmatpush.bf16.msra.mxu0 %v555
        %574 = vmatmul.bf16.gmra.mxu0 %v564
        %v575 = vpop.f32.mrf.mxu0
        %v576 = vadd.f32 0.0, %v575
        %v577 = vpop.f32.mrf.mxu0
        %v578 = vadd.f32 0.0, %v577
        %579 = vdwg.mxu0
        %v580 = vadd.f32 %v523, %v576
        %v581 = vadd.f32 %v525, %v578
        %v582 = vld [vmem:[%s4] sm:$0x1]
        %v584 = vperm.slane %v582, 0
        %v586 = vmul.f32 %v580, %v584
        %v587 = vmul.f32 %v581, %v584
        %v588 = vld [vmem:[%s5] sm:$0x1]
        %v590 = vperm.slane %v588, 0
        %v592 = vadd.f32 %v586, %v590
        %v593 = vadd.f32 %v587, %v590
        %v594 = vmax.f32 %v592, 0.0
        %v595 = vmax.f32 %v593, 0.0
        %596 = vst [vmem:[#allocation3] sm:$0x1] 0.0
        %597 = vst [vmem:[#allocation3 + $0x11] sm:$0x1] 0.0
        %598 = vst [vmem:[#allocation3 + $0x1] sm:$0xff] %v594
        %599 = vst [vmem:[#allocation3 + $0x9] sm:$0xff] %v595
        %v600 = vld [vmem:[#allocation3] sm:$0xff]
        %v601 = vld [vmem:[#allocation3 + $0x8] sm:$0xff]
        %v602 = vpack.c.bf16 %v601, %v600
        %v603 = vld [vmem:[#allocation10] sm:$0xf]
        %v604 = vld [vmem:[#allocation10 + $0x4] sm:$0xf]
        %v605 = vld [vmem:[#allocation10 + $0x8] sm:$0xf]
        %v606 = vld [vmem:[#allocation10 + $0xc] sm:$0xf]
        %v607 = vld [vmem:[#allocation10 + $0x10] sm:$0xf]
        %v608 = vld [vmem:[#allocation10 + $0x14] sm:$0xf]
        %v609 = vld [vmem:[#allocation10 + $0x18] sm:$0xf]
        %v610 = vld [vmem:[#allocation10 + $0x1c] sm:$0xf]
        %v611 = vld [vmem:[#allocation10 + $0x20] sm:$0xf]
        %v612 = vld [vmem:[#allocation10 + $0x24] sm:$0xf]
        %v613 = vld [vmem:[#allocation10 + $0x28] sm:$0xf]
        %v614 = vld [vmem:[#allocation10 + $0x2c] sm:$0xf]
        %v615 = vld [vmem:[#allocation10 + $0x30] sm:$0xf]
        %v616 = vld [vmem:[#allocation10 + $0x34] sm:$0xf]
        %v617 = vld [vmem:[#allocation10 + $0x38] sm:$0xf]
        %v618 = vld [vmem:[#allocation10 + $0x3c] sm:$0xf]
        %v635 = vunpack.c.l.b16 %v603
        %v636 = vunpack.c.l.b16 %v604
        %v637 = vunpack.c.l.b16 %v605
        %v638 = vunpack.c.l.b16 %v606
        %v639 = vunpack.c.l.b16 %v607
        %v640 = vunpack.c.l.b16 %v608
        %v641 = vunpack.c.l.b16 %v609
        %v642 = vunpack.c.l.b16 %v610
        %v643 = vunpack.c.l.b16 %v611
        %v644 = vunpack.c.l.b16 %v612
        %v645 = vunpack.c.l.b16 %v613
        %v646 = vunpack.c.l.b16 %v614
        %v647 = vunpack.c.l.b16 %v615
        %v648 = vunpack.c.l.b16 %v616
        %v649 = vunpack.c.l.b16 %v617
        %v650 = vunpack.c.l.b16 %v618
        %v651 = vpack.c.b16 %v636, %v635
        %v652 = vpack.c.b16 %v638, %v637
        %v653 = vpack.c.b16 %v640, %v639
        %v654 = vpack.c.b16 %v642, %v641
        %v655 = vpack.c.b16 %v644, %v643
        %v656 = vpack.c.b16 %v646, %v645
        %v657 = vpack.c.b16 %v648, %v647
        %v658 = vpack.c.b16 %v650, %v649
        %667 = vmatpush.bf16.msra.mxu0 %v658
        %668 = vmatpush.bf16.msra.mxu0 %v657
        %669 = vmatpush.bf16.msra.mxu0 %v656
        %670 = vmatpush.bf16.msra.mxu0 %v655
        %671 = vmatpush.bf16.msra.mxu0 %v654
        %672 = vmatpush.bf16.msra.mxu0 %v653
        %673 = vmatpush.bf16.msra.mxu0 %v652
        %674 = vmatpush.bf16.msra.mxu0 %v651
        %675 = vmatmul.bf16.gmra.mxu0 %v602
        %v676 = vpop.f32.mrf.mxu0
        %v677 = vadd.f32 0.0, %v676
        %v678 = vpop.f32.mrf.mxu0
        %v679 = vadd.f32 0.0, %v678
        %680 = vdwg.mxu0
        %v689 = vunpack.c.l.b16 %v408
        %v690 = vunpack.c.l.b16 %v409
        %v691 = vunpack.c.l.b16 %v410
        %v692 = vunpack.c.l.b16 %v411
        %v693 = vunpack.c.l.b16 %v412
        %v694 = vunpack.c.l.b16 %v413
        %v695 = vunpack.c.l.b16 %v414
        %v696 = vunpack.c.l.b16 %v415
        %v697 = vpack.c.b16 %v690, %v689
        %v698 = vpack.c.b16 %v692, %v691
        %v699 = vpack.c.b16 %v694, %v693
        %v700 = vpack.c.b16 %v696, %v695
        %v706 = vsel %vm419, %v407, 0
        %708 = vmatpush.bf16.msra.mxu0 0
        %709 = vmatpush.bf16.msra.mxu0 0
        %710 = vmatpush.bf16.msra.mxu0 0
        %711 = vmatpush.bf16.msra.mxu0 0
        %712 = vmatpush.bf16.msra.mxu0 %v700
        %713 = vmatpush.bf16.msra.mxu0 %v699
        %714 = vmatpush.bf16.msra.mxu0 %v698
        %715 = vmatpush.bf16.msra.mxu0 %v697
        %716 = vmatmul.bf16.gmra.mxu0 %v706
        %v717 = vpop.f32.mrf.mxu0
        %v718 = vadd.f32 %v677, %v717
        %v719 = vpop.f32.mrf.mxu0
        %v720 = vadd.f32 %v679, %v719
        %721 = vdwg.mxu0
        %v722 = vld [vmem:[#allocation3 + $0x1] sm:$0xff]
        %v723 = vld [vmem:[#allocation3 + $0x9] sm:$0xff]
        %v724 = vpack.c.bf16 %v723, %v722
        %s725 = scalar_lea.vmem [#allocation10], 64
        %v726 = vld [vmem:[%s725] sm:$0xf]
        %v727 = vld [vmem:[%s725 + $0x4] sm:$0xf]
        %v728 = vld [vmem:[%s725 + $0x8] sm:$0xf]
        %v729 = vld [vmem:[%s725 + $0xc] sm:$0xf]
        %v730 = vld [vmem:[%s725 + $0x10] sm:$0xf]
        %v731 = vld [vmem:[%s725 + $0x14] sm:$0xf]
        %v732 = vld [vmem:[%s725 + $0x18] sm:$0xf]
        %v733 = vld [vmem:[%s725 + $0x1c] sm:$0xf]
        %v734 = vld [vmem:[%s725 + $0x20] sm:$0xf]
        %v735 = vld [vmem:[%s725 + $0x24] sm:$0xf]
        %v736 = vld [vmem:[%s725 + $0x28] sm:$0xf]
        %v737 = vld [vmem:[%s725 + $0x2c] sm:$0xf]
        %v738 = vld [vmem:[%s725 + $0x30] sm:$0xf]
        %v739 = vld [vmem:[%s725 + $0x34] sm:$0xf]
        %v740 = vld [vmem:[%s725 + $0x38] sm:$0xf]
        %v741 = vld [vmem:[%s725 + $0x3c] sm:$0xf]
        %v758 = vunpack.c.l.b16 %v726
        %v759 = vunpack.c.l.b16 %v727
        %v760 = vunpack.c.l.b16 %v728
        %v761 = vunpack.c.l.b16 %v729
        %v762 = vunpack.c.l.b16 %v730
        %v763 = vunpack.c.l.b16 %v731
        %v764 = vunpack.c.l.b16 %v732
        %v765 = vunpack.c.l.b16 %v733
        %v766 = vunpack.c.l.b16 %v734
        %v767 = vunpack.c.l.b16 %v735
        %v768 = vunpack.c.l.b16 %v736
        %v769 = vunpack.c.l.b16 %v737
        %v770 = vunpack.c.l.b16 %v738
        %v771 = vunpack.c.l.b16 %v739
        %v772 = vunpack.c.l.b16 %v740
        %v773 = vunpack.c.l.b16 %v741
        %v774 = vpack.c.b16 %v759, %v758
        %v775 = vpack.c.b16 %v761, %v760
        %v776 = vpack.c.b16 %v763, %v762
        %v777 = vpack.c.b16 %v765, %v764
        %v778 = vpack.c.b16 %v767, %v766
        %v779 = vpack.c.b16 %v769, %v768
        %v780 = vpack.c.b16 %v771, %v770
        %v781 = vpack.c.b16 %v773, %v772
        %790 = vmatpush.bf16.msra.mxu0 %v781
        %791 = vmatpush.bf16.msra.mxu0 %v780
        %792 = vmatpush.bf16.msra.mxu0 %v779
        %793 = vmatpush.bf16.msra.mxu0 %v778
        %794 = vmatpush.bf16.msra.mxu0 %v777
        %795 = vmatpush.bf16.msra.mxu0 %v776
        %796 = vmatpush.bf16.msra.mxu0 %v775
        %797 = vmatpush.bf16.msra.mxu0 %v774
        %798 = vmatmul.bf16.gmra.mxu0 %v724
        %v799 = vpop.f32.mrf.mxu0
        %v800 = vadd.f32 0.0, %v799
        %v801 = vpop.f32.mrf.mxu0
        %v802 = vadd.f32 0.0, %v801
        %803 = vdwg.mxu0
        %v804 = vadd.f32 %v718, %v800
        %v805 = vadd.f32 %v720, %v802
        %v806 = vld [vmem:[#allocation3 + $0x2] sm:$0xff]
        %v807 = vld [vmem:[#allocation3 + $0xa] sm:$0xff]
        %v808 = vpack.c.bf16 %v807, %v806
        %s809 = scalar_lea.vmem [#allocation10], 128
        %v810 = vld [vmem:[%s809] sm:$0xf]
        %v811 = vld [vmem:[%s809 + $0x4] sm:$0xf]
        %v812 = vld [vmem:[%s809 + $0x8] sm:$0xf]
        %v813 = vld [vmem:[%s809 + $0xc] sm:$0xf]
        %v814 = vld [vmem:[%s809 + $0x10] sm:$0xf]
        %v815 = vld [vmem:[%s809 + $0x14] sm:$0xf]
        %v816 = vld [vmem:[%s809 + $0x18] sm:$0xf]
        %v817 = vld [vmem:[%s809 + $0x1c] sm:$0xf]
        %v818 = vld [vmem:[%s809 + $0x20] sm:$0xf]
        %v819 = vld [vmem:[%s809 + $0x24] sm:$0xf]
        %v820 = vld [vmem:[%s809 + $0x28] sm:$0xf]
        %v821 = vld [vmem:[%s809 + $0x2c] sm:$0xf]
        %v822 = vld [vmem:[%s809 + $0x30] sm:$0xf]
        %v823 = vld [vmem:[%s809 + $0x34] sm:$0xf]
        %v824 = vld [vmem:[%s809 + $0x38] sm:$0xf]
        %v825 = vld [vmem:[%s809 + $0x3c] sm:$0xf]
        %v842 = vunpack.c.l.b16 %v810
        %v843 = vunpack.c.l.b16 %v811
        %v844 = vunpack.c.l.b16 %v812
        %v845 = vunpack.c.l.b16 %v813
        %v846 = vunpack.c.l.b16 %v814
        %v847 = vunpack.c.l.b16 %v815
        %v848 = vunpack.c.l.b16 %v816
        %v849 = vunpack.c.l.b16 %v817
        %v850 = vunpack.c.l.b16 %v818
        %v851 = vunpack.c.l.b16 %v819
        %v852 = vunpack.c.l.b16 %v820
        %v853 = vunpack.c.l.b16 %v821
        %v854 = vunpack.c.l.b16 %v822
        %v855 = vunpack.c.l.b16 %v823
        %v856 = vunpack.c.l.b16 %v824
        %v857 = vunpack.c.l.b16 %v825
        %v858 = vpack.c.b16 %v843, %v842
        %v859 = vpack.c.b16 %v845, %v844
        %v860 = vpack.c.b16 %v847, %v846
        %v861 = vpack.c.b16 %v849, %v848
        %v862 = vpack.c.b16 %v851, %v850
        %v863 = vpack.c.b16 %v853, %v852
        %v864 = vpack.c.b16 %v855, %v854
        %v865 = vpack.c.b16 %v857, %v856
        %874 = vmatpush.bf16.msra.mxu0 %v865
        %875 = vmatpush.bf16.msra.mxu0 %v864
        %876 = vmatpush.bf16.msra.mxu0 %v863
        %877 = vmatpush.bf16.msra.mxu0 %v862
        %878 = vmatpush.bf16.msra.mxu0 %v861
        %879 = vmatpush.bf16.msra.mxu0 %v860
        %880 = vmatpush.bf16.msra.mxu0 %v859
        %881 = vmatpush.bf16.msra.mxu0 %v858
        %882 = vmatmul.bf16.gmra.mxu0 %v808
        %v883 = vpop.f32.mrf.mxu0
        %v884 = vadd.f32 0.0, %v883
        %v885 = vpop.f32.mrf.mxu0
        %v886 = vadd.f32 0.0, %v885
        %887 = vdwg.mxu0
        %v888 = vadd.f32 %v804, %v884
        %v889 = vadd.f32 %v805, %v886
        %890 = vst [vmem:[%s389] sm:$0xff] %v888
        %891 = vst [vmem:[%s389 + $0x8] sm:$0xff] %v889
        %s892 = sand.u32 %s208, 1
        %s893 = scalar_lea.sflag [#allocation6], %s892
        %s894 = sand.u32 %s208, 1
        %s895 = smul.addr %s894, 16
        %s896 = scalar_lea.vmem [#allocation13], %s895
        // Predicated region
        $region73: #{tpu_custom_call.1} parent=51 // pred_check
          %p897 = pneg %p218
        $region74: #{tpu_custom_call.1} parent=51 // pred_check_branch
          %899 = sbr.rel (%p897) target = $region76
        $region75: #{tpu_custom_call.1} parent=51 // pred_region
          %901 = vsyncadd %s893, 0
          %s902 = smul.addr %s27, 2
          %s903 = smul.addr %s902, 8
          %s904 = scalar_lea.hbm %s8, %s903
          %s905 = sshll.u32 %s896, 4
          %s906 = int_to_ptr.vmem [resolvable:$true] %s905
          %s907 = sshll.u32 %s904, 4
          %s908 = int_to_ptr.hbm [resolvable:$true] %s907
          %913 = dma.vmem_to_hbm [thread:$0]  %s906, 256, %s908, %s893, 128, 128, 8
        $region76: #{tpu_custom_call.1} parent=51 // pred_fallthru
          _
      $region52: #{tpu_custom_call.1} parent=5 // pred_fallthru
        _
      %p914 = scmp.le.s32.totalorder 2, %s22
      // Predicated region
      $region77: #{tpu_custom_call.1} parent=5 // pred_check
        %p915 = pneg %p914
      $region78: #{tpu_custom_call.1} parent=5 // pred_check_branch
        %917 = sbr.rel (%p915) target = $region80
      $region79: #{tpu_custom_call.1} parent=5 // pred_region
        %s918 = ssub.s32 %s22, 2
        // Predicated region
        $region81: #{tpu_custom_call.1} parent=79 // pred_check
          %p919 = pneg %p224
        $region82: #{tpu_custom_call.1} parent=79 // pred_check_branch
          %921 = sbr.rel (%p919) target = $region84
        $region83: #{tpu_custom_call.1} parent=79 // pred_region
          %s922 = sand.u32 %s209, 1
          %s923 = scalar_lea.sflag [#allocation6], %s922
          %s924 = sand.u32 %s209, 1
          %s925 = smul.addr %s924, 16
          %s926 = scalar_lea.vmem [#allocation13], %s925
          %928 = dma.done %s923, 256
        $region84: #{tpu_custom_call.1} parent=79 // pred_fallthru
          _
      $region80: #{tpu_custom_call.1} parent=5 // pred_fallthru
        _
    $region6: #{tpu_custom_call.1} parent=1 // loop_footer
      %s26 = sadd.s32 1, %s22
    $region7: #{tpu_custom_call.1} parent=1 // loop_footer_branch
      %21 = sbr.rel target = $region3
    $region8: #{tpu_custom_call.1} parent=1 // loop_exit
      _
    %929 = vsyncpa [#allocation5], 1
    %s930 = scalar_lea.sflag [#allocation5], 1
    %931 = vsyncpa %s930, 1
    %932 = vsyncpa [#allocation8], 1
    %933 = vsyncpa [#allocation11], 1
    %934 = vsyncpa [#allocation6], 1
    %s935 = scalar_lea.sflag [#allocation6], 1
    %936 = vsyncpa %s935, 1

</llo_original>
